<compile_context>
chip_gen: v7x
topology: tpu7x:2x2x1
jax: 0.10.0
libtpu: 0.0.40
codegen_flags: <defaults>
</compile_context>

<pallas_src>
import functools

import jax
import jax.numpy as jnp
import numpy as np
from jax.experimental import pallas as pl
from jax.experimental.pallas import tpu as pltpu

_BN_EPS = 1e-5  # PyTorch BatchNorm2d default eps


# ---------------------------------------------------------------------------
# The single fused kernel
# ---------------------------------------------------------------------------
def _fused_forward_kernel(x_ref, w1_ref, b1_ref, w2_ref, b2_ref,
                          fcw_ref, fcb_ref, m1_ref, m2_ref, o_ref,
                          *, B, Hp, W, C1):
    R = B * Hp          # rows of the (batch, padded-y) feature grid
    RE = R + 2          # conv1 output keeps one guard row on each side

    # ---- conv1 + folded BN + ReLU : 3 banded block-Toeplitz matmuls --------
    # rows = (batch, padded-y); lanes = (padded-x, cin) -> (x, cout), N = W*C1.
    xv = x_ref[...]                                        # (R + 4, Wp*Cin)
    acc1 = jnp.dot(xv[0:RE], w1_ref[0], preferred_element_type=jnp.float32)
    for dy in (1, 2):                                      # static row-shifted taps
        acc1 = acc1 + jnp.dot(xv[dy:dy + RE], w1_ref[dy],
                              preferred_element_type=jnp.float32)
    # One vmul against a precomputed 0/1 row mask zeroes the y-padding / guard
    # rows exactly (post-ReLU values are >= 0), giving conv2 its zero padding.
    y1 = jnp.maximum(acc1 + b1_ref[...], 0.0) * m1_ref[...]   # (RE, W*C1)

    # ---- conv2 + folded BN + ReLU : K = N = W*C1 (128 lanes exactly) --------
    acc2 = jnp.dot(y1[0:R], w2_ref[0], preferred_element_type=jnp.float32)
    for dy in (1, 2):
        acc2 = acc2 + jnp.dot(y1[dy:dy + R], w2_ref[dy],
                              preferred_element_type=jnp.float32)
    # Zero the rows outside the valid HxW region so the batched y-max below
    # can run over all Hp rows per image (values are >= 0, zeros never win).
    y2 = jnp.maximum(acc2 + b2_ref[...], 0.0) * m2_ref[...]   # (R, W*C1)

    # ---- MaxPool2d(2,2,pad=1) + AdaptiveMaxPool2d((1,1)) == global max over
    #      the valid HxW region (max is associative; -inf pool padding and the
    #      zeroed rows never win against ReLU outputs).
    # TODO(synk): nn.Dropout(0.25) training-mode RNG masking not implemented;
    # inference-mode identity semantics are used here.
    rows = [jnp.max(y2[b * Hp:(b + 1) * Hp], axis=0, keepdims=True)
            for b in range(B)]                               # per-image y-max
    m = jnp.concatenate(rows, axis=0) if B > 1 else rows[0]  # (B, W*C1)

    # x-max as a log-tree of circular lane rotations (XLU) + max (VPU);
    # lanes are (x, c) and the lane width is exactly W*C1, so the rotation
    # cycles x (mod W) with c fixed.  4 steps instead of a 15-long serial chain.
    s = C1
    while s < W * C1:
        m = jnp.maximum(m, pltpu.roll(m, shift=s, axis=1))
        s *= 2
    g = m[:, 0:C1]                                           # (B, C1) global max

    # ---- Linear + Softmax(dim=1), fully batched ------------------------------
    logits = jnp.dot(g, fcw_ref[...],
                     preferred_element_type=jnp.float32) + fcb_ref[...]
    z = jnp.exp(logits - jnp.max(logits, axis=1, keepdims=True))
    # EUP reciprocal instead of a VPU divide; approx=False keeps the softmax
    # normalisation exact.
    o_ref[...] = z * pl.reciprocal(jnp.sum(z, axis=1, keepdims=True), approx=False)


# ---------------------------------------------------------------------------
# One-time (setup) weight preprocessing -- pure numpy, zero per-call cost
# ---------------------------------------------------------------------------
def _fold_bn_np(w, b, gamma, beta, mean, var):
    """Fold eval-mode BatchNorm2d into the preceding conv's weight and bias."""
    w = np.asarray(w, np.float32)
    b = np.asarray(b, np.float32)
    gamma = np.asarray(gamma, np.float32)
    beta = np.asarray(beta, np.float32)
    mean = np.asarray(mean, np.float32)
    var = np.asarray(var, np.float32)
    scale = gamma / np.sqrt(var + _BN_EPS)
    return w * scale[:, None, None, None], (b - mean) * scale + beta


def _toeplitz_np(w_folded, W, pad_in, pad_out):
    """(Cout,Cin,3,3) conv weight -> 3 banded block-Toeplitz matrices (one per
    kernel row dy) acting on rows packed as lanes=(x, channel).

    pad_in : input lanes include the two x-padding columns (width W+2).
    pad_out: output lanes include the two x-padding columns (width W+2);
             with pad_out=False, x zero-padding is absorbed into the band
             (out-of-range input taps are simply dropped)."""
    Cout, Cin, KH, KW = w_folded.shape
    Win = W + 2 if pad_in else W
    Xout = W + 2 if pad_out else W
    in_off = 1 if pad_in else 0
    out_off = 1 if pad_out else 0
    sel = np.zeros((Win, Xout, KW), np.float32)     # sel[x_in, x_out, dx]
    for xo in range(Xout):
        x0 = xo - out_off                           # original output column
        if x0 < 0 or x0 >= W:
            continue                                # output padding column -> zero
        for dx in range(KW):
            xi = x0 - 1 + dx                        # original input column
            if pad_in:
                sel[xi + in_off, xo, dx] = 1.0      # padded input col (zero data if OOB)
            elif 0 <= xi < W:
                sel[xi, xo, dx] = 1.0               # drop zero-padding taps
    t = np.einsum('xXk,ocdk->dxcXo', sel, w_folded)
    return t.reshape(KH, Win * Cin, Xout * Cout)


def _bias_np(b_folded, Xout):
    """Tile the per-channel bias over the (x, channel) output lanes."""
    return np.tile(np.asarray(b_folded, np.float32)[None, :], (1, Xout))


def _row_masks_np(B, Hp):
    """0/1 row masks zeroing (a) conv1's guard + y-padding rows (RE rows) and
    (b) conv2's rows outside the valid HxW region (R rows)."""
    R = B * Hp
    RE = R + 2
    m1 = np.ones((RE, 1), np.float32)
    m1[0, 0] = 0.0
    m1[RE - 1, 0] = 0.0
    m2 = np.ones((R, 1), np.float32)
    for b in range(B):
        m1[1 + b * Hp, 0] = 0.0
        m1[1 + b * Hp + Hp - 1, 0] = 0.0
        m2[b * Hp, 0] = 0.0
        m2[b * Hp + Hp - 1, 0] = 0.0
    return m1, m2


# ---------------------------------------------------------------------------
# Builder: preprocess weights once, return a jitted single-dispatch forward
# ---------------------------------------------------------------------------
def make_pytorch_cnn_large_forward(params, *, batch, input_shape):
    Cin, H, W = input_shape
    B = batch
    Hp, Wp = H + 2, W + 2
    nk = np.asarray(params["conv1_w"]).shape[0]
    nout = np.asarray(params["fc_w"]).shape[0]

    # --- weight-only preprocessing, done exactly once ---
    w1f, b1f = _fold_bn_np(params["conv1_w"], params["conv1_b"], params["bn1_gamma"],
                           params["bn1_beta"], params["bn1_mean"], params["bn1_var"])
    w2f, b2f = _fold_bn_np(params["conv2_w"], params["conv2_b"], params["bn2_gamma"],
                           params["bn2_beta"], params["bn2_mean"], params["bn2_var"])

    w1 = jnp.asarray(_toeplitz_np(w1f, W, pad_in=True, pad_out=False))   # (3, Wp*Cin, W*nk)
    w2 = jnp.asarray(_toeplitz_np(w2f, W, pad_in=False, pad_out=False))  # (3, W*nk,  W*nk)
    b1 = jnp.asarray(_bias_np(b1f, W))                                   # (1, W*nk)
    b2 = jnp.asarray(_bias_np(b2f, W))                                   # (1, W*nk)
    fcw = jnp.asarray(np.asarray(params["fc_w"], np.float32).T)          # (nk, nout)
    fcb = jnp.asarray(np.asarray(params["fc_b"], np.float32).reshape(1, nout))
    m1_np, m2_np = _row_masks_np(B, Hp)
    m1 = jnp.asarray(m1_np)                                              # (B*Hp+2, 1)
    m2 = jnp.asarray(m2_np)                                              # (B*Hp,   1)

    kernel = functools.partial(_fused_forward_kernel, B=B, Hp=Hp, W=W, C1=nk)
    vmem = pl.BlockSpec(memory_space=pltpu.MemorySpace.VMEM)
    call = pl.pallas_call(
        kernel,
        out_shape=jax.ShapeDtypeStruct((B, nout), jnp.float32),
        in_specs=[vmem] * 9,
        out_specs=vmem,
    )

    @jax.jit
    def forward(x_nchw):
        # NCHW -> NHWC, zero-pad spatially, pack rows=(batch, padded-y) and
        # lanes=(padded-x, channel); 2 zero guard rows top/bottom turn the 3
        # conv row-taps into plain static row slices inside the kernel.
        x = jnp.transpose(x_nchw, (0, 2, 3, 1)).astype(jnp.float32)
        xp = jnp.pad(x, ((0, 0), (1, 1), (1, 1), (0, 0)))
        xrows = jnp.pad(xp.reshape(B * Hp, Wp * Cin), ((2, 2), (0, 0)))
        return call(xrows, w1, b1, w2, b2, fcw, fcb, m1, m2)

    return forward


# ---------------------------------------------------------------------------
# Pure-JAX (XLA) reference, used only to validate the kernel at runtime
# ---------------------------------------------------------------------------
def _reference_forward(x_nchw, params):
    def conv_bn_relu(x, w, b, gamma, beta, mean, var):
        y = jax.lax.conv_general_dilated(
            x.astype(jnp.float32), w.astype(jnp.float32),
            window_strides=(1, 1), padding=((1, 1), (1, 1)),
            dimension_numbers=('NCHW', 'OIHW', 'NCHW'))
        y = y + b[None, :, None, None]
        inv = gamma / jnp.sqrt(var + _BN_EPS)
        y = (y - mean[None, :, None, None]) * inv[None, :, None, None] \
            + beta[None, :, None, None]
        return jnp.maximum(y, 0.0)

    y = conv_bn_relu(x_nchw, params["conv1_w"], params["conv1_b"],
                     params["bn1_gamma"], params["bn1_beta"],
                     params["bn1_mean"], params["bn1_var"])
    y = conv_bn_relu(y, params["conv2_w"], params["conv2_b"],
                     params["bn2_gamma"], params["bn2_beta"],
                     params["bn2_mean"], params["bn2_var"])
    # MaxPool2d(kernel=2, stride=2, padding=1), -inf padding (PyTorch semantics)
    y = jax.lax.reduce_window(y, -jnp.inf, jax.lax.max,
                              (1, 1, 2, 2), (1, 1, 2, 2),
                              ((0, 0), (0, 0), (1, 1), (1, 1)))
    g = jnp.max(y, axis=(2, 3))                        # AdaptiveMaxPool2d((1,1))
    logits = g @ params["fc_w"].T + params["fc_b"]     # Dropouts = identity (eval)
    return jax.nn.softmax(logits, axis=1)


# ---------------------------------------------------------------------------
if __name__ == "__main__":
    B, C, H, W = 2, 4, 16, 16        # input_shape = (4, 16, 16), batch = 2
    nk, num_outputs = 8, 10          # num_kernels = 8, num_classes = 10

    key = jax.random.PRNGKey(0)
    ks = jax.random.split(key, 16)
    params = {
        "conv1_w": 0.2 * jax.random.normal(ks[0], (nk, C, 3, 3), jnp.float32),
        "conv1_b": 0.1 * jax.random.normal(ks[1], (nk,), jnp.float32),
        "bn1_gamma": 1.0 + 0.1 * jax.random.normal(ks[2], (nk,), jnp.float32),
        "bn1_beta": 0.1 * jax.random.normal(ks[3], (nk,), jnp.float32),
        "bn1_mean": 0.1 * jax.random.normal(ks[4], (nk,), jnp.float32),
        "bn1_var": jax.random.uniform(ks[5], (nk,), jnp.float32, 0.5, 1.5),
        "conv2_w": 0.2 * jax.random.normal(ks[6], (nk, nk, 3, 3), jnp.float32),
        "conv2_b": 0.1 * jax.random.normal(ks[7], (nk,), jnp.float32),
        "bn2_gamma": 1.0 + 0.1 * jax.random.normal(ks[8], (nk,), jnp.float32),
        "bn2_beta": 0.1 * jax.random.normal(ks[9], (nk,), jnp.float32),
        "bn2_mean": 0.1 * jax.random.normal(ks[10], (nk,), jnp.float32),
        "bn2_var": jax.random.uniform(ks[11], (nk,), jnp.float32, 0.5, 1.5),
        # PyTorch Linear weight layout: (num_outputs, in_features)
        "fc_w": 0.2 * jax.random.normal(ks[12], (num_outputs, nk), jnp.float32),
        "fc_b": 0.1 * jax.random.normal(ks[13], (num_outputs,), jnp.float32),
    }
    x = jax.random.normal(ks[14], (B, C, H, W), jnp.float32)   # NCHW, as PyTorch

    # Weight preprocessing happens exactly once here; per-call path is a single
    # jitted dispatch (relayout + fused Pallas kernel).
    forward = make_pytorch_cnn_large_forward(params, batch=B, input_shape=(C, H, W))

    out = jax.block_until_ready(forward(x))
    ref = jax.block_until_ready(_reference_forward(x, params))

    assert out.shape == (B, num_outputs)
    assert bool(jnp.all(jnp.isfinite(out)))
    assert bool(jnp.allclose(jnp.sum(out, axis=1), 1.0, atol=1e-4))
    assert bool(jnp.allclose(out, ref, atol=5e-4, rtol=5e-4)), \
        f"max abs diff vs reference: {float(jnp.max(jnp.abs(out - ref)))}"
    print("KERNEL_OK")
</pallas_src>

<mosaic_0001>
module attributes {stable_mosaic.version = 11 : i64} {
  func.func @_fused_forward_kernel(%arg0: memref<40x72xf32, #tpu.memory_space<vmem>>, %arg1: memref<3x72x128xf32, #tpu.memory_space<vmem>>, %arg2: memref<1x128xf32, #tpu.memory_space<vmem>>, %arg3: memref<3x128x128xf32, #tpu.memory_space<vmem>>, %arg4: memref<1x128xf32, #tpu.memory_space<vmem>>, %arg5: memref<8x10xf32, #tpu.memory_space<vmem>>, %arg6: memref<1x10xf32, #tpu.memory_space<vmem>>, %arg7: memref<38x1xf32, #tpu.memory_space<vmem>>, %arg8: memref<36x1xf32, #tpu.memory_space<vmem>>, %arg9: memref<2x10xf32, #tpu.memory_space<vmem>>) attributes {dimension_semantics = [], scalar_prefetch = 0 : i64, scratch_operands = 0 : i64, tpu.core_type = #tpu.core_type<tc>} {
    %c0 = arith.constant 0 : index
    %c0_0 = arith.constant 0 : index
    %0 = vector.load %arg0[%c0, %c0_0] : memref<40x72xf32, #tpu.memory_space<vmem>>, vector<40x72xf32>
    %1 = vector.extract_strided_slice %0 {offsets = [0, 0], sizes = [38, 72], strides = [1, 1]} : vector<40x72xf32> to vector<38x72xf32>
    %c0_1 = arith.constant 0 : index
    %c0_2 = arith.constant 0 : index
    %c0_3 = arith.constant 0 : index
    %2 = vector.load %arg1[%c0_1, %c0_2, %c0_3] : memref<3x72x128xf32, #tpu.memory_space<vmem>>, vector<1x72x128xf32>
    %3 = vector.shape_cast %2 : vector<1x72x128xf32> to vector<72x128xf32>
    %cst = arith.constant dense<0.000000e+00> : vector<38x128xf32>
    %4 = tpu.matmul %1, %3, %cst {dimension_numbers = #tpu.dot_dimension_numbers<[1], [0], [0], [1], [0, 0, 1, 1], [], []>} : vector<38x72xf32>, vector<72x128xf32>, vector<38x128xf32> -> vector<38x128xf32>
    %5 = vector.extract_strided_slice %0 {offsets = [1, 0], sizes = [38, 72], strides = [1, 1]} : vector<40x72xf32> to vector<38x72xf32>
    %c1 = arith.constant 1 : index
    %c0_4 = arith.constant 0 : index
    %c0_5 = arith.constant 0 : index
    %6 = vector.load %arg1[%c1, %c0_4, %c0_5] : memref<3x72x128xf32, #tpu.memory_space<vmem>>, vector<1x72x128xf32>
    %7 = vector.shape_cast %6 : vector<1x72x128xf32> to vector<72x128xf32>
    %cst_6 = arith.constant dense<0.000000e+00> : vector<38x128xf32>
    %8 = tpu.matmul %5, %7, %cst_6 {dimension_numbers = #tpu.dot_dimension_numbers<[1], [0], [0], [1], [0, 0, 1, 1], [], []>} : vector<38x72xf32>, vector<72x128xf32>, vector<38x128xf32> -> vector<38x128xf32>
    %9 = arith.addf %4, %8 : vector<38x128xf32>
    %10 = vector.extract_strided_slice %0 {offsets = [2, 0], sizes = [38, 72], strides = [1, 1]} : vector<40x72xf32> to vector<38x72xf32>
    %c2 = arith.constant 2 : index
    %c0_7 = arith.constant 0 : index
    %c0_8 = arith.constant 0 : index
    %11 = vector.load %arg1[%c2, %c0_7, %c0_8] : memref<3x72x128xf32, #tpu.memory_space<vmem>>, vector<1x72x128xf32>
    %12 = vector.shape_cast %11 : vector<1x72x128xf32> to vector<72x128xf32>
    %cst_9 = arith.constant dense<0.000000e+00> : vector<38x128xf32>
    %13 = tpu.matmul %10, %12, %cst_9 {dimension_numbers = #tpu.dot_dimension_numbers<[1], [0], [0], [1], [0, 0, 1, 1], [], []>} : vector<38x72xf32>, vector<72x128xf32>, vector<38x128xf32> -> vector<38x128xf32>
    %14 = arith.addf %9, %13 : vector<38x128xf32>
    %c0_10 = arith.constant 0 : index
    %c0_11 = arith.constant 0 : index
    %15 = vector.load %arg2[%c0_10, %c0_11] : memref<1x128xf32, #tpu.memory_space<vmem>>, vector<1x128xf32>
    %16 = vector.broadcast %15 : vector<1x128xf32> to vector<38x128xf32>
    %17 = arith.addf %14, %16 : vector<38x128xf32>
    %cst_12 = arith.constant 0.000000e+00 : f32
    %18 = vector.broadcast %cst_12 : f32 to vector<38x128xf32>
    %19 = arith.maximumf %17, %18 : vector<38x128xf32>
    %c0_13 = arith.constant 0 : index
    %c0_14 = arith.constant 0 : index
    %20 = vector.load %arg7[%c0_13, %c0_14] : memref<38x1xf32, #tpu.memory_space<vmem>>, vector<38x1xf32>
    %21 = vector.broadcast %20 : vector<38x1xf32> to vector<38x128xf32>
    %22 = arith.mulf %19, %21 : vector<38x128xf32>
    %23 = vector.extract_strided_slice %22 {offsets = [0, 0], sizes = [36, 128], strides = [1, 1]} : vector<38x128xf32> to vector<36x128xf32>
    %c0_15 = arith.constant 0 : index
    %c0_16 = arith.constant 0 : index
    %c0_17 = arith.constant 0 : index
    %24 = vector.load %arg3[%c0_15, %c0_16, %c0_17] : memref<3x128x128xf32, #tpu.memory_space<vmem>>, vector<1x128x128xf32>
    %25 = vector.shape_cast %24 : vector<1x128x128xf32> to vector<128x128xf32>
    %cst_18 = arith.constant dense<0.000000e+00> : vector<36x128xf32>
    %26 = tpu.matmul %23, %25, %cst_18 {dimension_numbers = #tpu.dot_dimension_numbers<[1], [0], [0], [1], [0, 0, 1, 1], [], []>} : vector<36x128xf32>, vector<128x128xf32>, vector<36x128xf32> -> vector<36x128xf32>
    %27 = vector.extract_strided_slice %22 {offsets = [1, 0], sizes = [36, 128], strides = [1, 1]} : vector<38x128xf32> to vector<36x128xf32>
    %c1_19 = arith.constant 1 : index
    %c0_20 = arith.constant 0 : index
    %c0_21 = arith.constant 0 : index
    %28 = vector.load %arg3[%c1_19, %c0_20, %c0_21] : memref<3x128x128xf32, #tpu.memory_space<vmem>>, vector<1x128x128xf32>
    %29 = vector.shape_cast %28 : vector<1x128x128xf32> to vector<128x128xf32>
    %cst_22 = arith.constant dense<0.000000e+00> : vector<36x128xf32>
    %30 = tpu.matmul %27, %29, %cst_22 {dimension_numbers = #tpu.dot_dimension_numbers<[1], [0], [0], [1], [0, 0, 1, 1], [], []>} : vector<36x128xf32>, vector<128x128xf32>, vector<36x128xf32> -> vector<36x128xf32>
    %31 = arith.addf %26, %30 : vector<36x128xf32>
    %32 = vector.extract_strided_slice %22 {offsets = [2, 0], sizes = [36, 128], strides = [1, 1]} : vector<38x128xf32> to vector<36x128xf32>
    %c2_23 = arith.constant 2 : index
    %c0_24 = arith.constant 0 : index
    %c0_25 = arith.constant 0 : index
    %33 = vector.load %arg3[%c2_23, %c0_24, %c0_25] : memref<3x128x128xf32, #tpu.memory_space<vmem>>, vector<1x128x128xf32>
    %34 = vector.shape_cast %33 : vector<1x128x128xf32> to vector<128x128xf32>
    %cst_26 = arith.constant dense<0.000000e+00> : vector<36x128xf32>
    %35 = tpu.matmul %32, %34, %cst_26 {dimension_numbers = #tpu.dot_dimension_numbers<[1], [0], [0], [1], [0, 0, 1, 1], [], []>} : vector<36x128xf32>, vector<128x128xf32>, vector<36x128xf32> -> vector<36x128xf32>
    %36 = arith.addf %31, %35 : vector<36x128xf32>
    %c0_27 = arith.constant 0 : index
    %c0_28 = arith.constant 0 : index
    %37 = vector.load %arg4[%c0_27, %c0_28] : memref<1x128xf32, #tpu.memory_space<vmem>>, vector<1x128xf32>
    %38 = vector.broadcast %37 : vector<1x128xf32> to vector<36x128xf32>
    %39 = arith.addf %36, %38 : vector<36x128xf32>
    %cst_29 = arith.constant 0.000000e+00 : f32
    %40 = vector.broadcast %cst_29 : f32 to vector<36x128xf32>
    %41 = arith.maximumf %39, %40 : vector<36x128xf32>
    %c0_30 = arith.constant 0 : index
    %c0_31 = arith.constant 0 : index
    %42 = vector.load %arg8[%c0_30, %c0_31] : memref<36x1xf32, #tpu.memory_space<vmem>>, vector<36x1xf32>
    %43 = vector.broadcast %42 : vector<36x1xf32> to vector<36x128xf32>
    %44 = arith.mulf %41, %43 : vector<36x128xf32>
    %45 = vector.extract_strided_slice %44 {offsets = [0, 0], sizes = [18, 128], strides = [1, 1]} : vector<36x128xf32> to vector<18x128xf32>
    %cst_32 = arith.constant dense<0xFF800000> : vector<128xf32>
    %46 = vector.multi_reduction <maximumf>, %45, %cst_32 [0] : vector<18x128xf32> to vector<128xf32>
    %47 = vector.shape_cast %46 : vector<128xf32> to vector<1x128xf32>
    %48 = vector.extract_strided_slice %44 {offsets = [18, 0], sizes = [18, 128], strides = [1, 1]} : vector<36x128xf32> to vector<18x128xf32>
    %cst_33 = arith.constant dense<0xFF800000> : vector<128xf32>
    %49 = vector.multi_reduction <maximumf>, %48, %cst_33 [0] : vector<18x128xf32> to vector<128xf32>
    %50 = vector.shape_cast %49 : vector<128xf32> to vector<1x128xf32>
    %51 = tpu.concatenate %47, %50 in 0 : vector<1x128xf32>, vector<1x128xf32> -> vector<2x128xf32>
    %c8_i32 = arith.constant 8 : i32
    %52 = tpu.dynamic_rotate %51 by %c8_i32 dim 1 : vector<2x128xf32>, i32 -> vector<2x128xf32>
    %53 = arith.maximumf %51, %52 : vector<2x128xf32>
    %c16_i32 = arith.constant 16 : i32
    %54 = tpu.dynamic_rotate %53 by %c16_i32 dim 1 : vector<2x128xf32>, i32 -> vector<2x128xf32>
    %55 = arith.maximumf %53, %54 : vector<2x128xf32>
    %c32_i32 = arith.constant 32 : i32
    %56 = tpu.dynamic_rotate %55 by %c32_i32 dim 1 : vector<2x128xf32>, i32 -> vector<2x128xf32>
    %57 = arith.maximumf %55, %56 : vector<2x128xf32>
    %c64_i32 = arith.constant 64 : i32
    %58 = tpu.dynamic_rotate %57 by %c64_i32 dim 1 : vector<2x128xf32>, i32 -> vector<2x128xf32>
    %59 = arith.maximumf %57, %58 : vector<2x128xf32>
    %60 = vector.extract_strided_slice %59 {offsets = [0, 0], sizes = [2, 8], strides = [1, 1]} : vector<2x128xf32> to vector<2x8xf32>
    %c0_34 = arith.constant 0 : index
    %c0_35 = arith.constant 0 : index
    %61 = vector.load %arg5[%c0_34, %c0_35] : memref<8x10xf32, #tpu.memory_space<vmem>>, vector<8x10xf32>
    %cst_36 = arith.constant dense<0.000000e+00> : vector<2x10xf32>
    %62 = tpu.matmul %60, %61, %cst_36 {dimension_numbers = #tpu.dot_dimension_numbers<[1], [0], [0], [1], [0, 0, 1, 1], [], []>} : vector<2x8xf32>, vector<8x10xf32>, vector<2x10xf32> -> vector<2x10xf32>
    %c0_37 = arith.constant 0 : index
    %c0_38 = arith.constant 0 : index
    %63 = vector.load %arg6[%c0_37, %c0_38] : memref<1x10xf32, #tpu.memory_space<vmem>>, vector<1x10xf32>
    %64 = vector.broadcast %63 : vector<1x10xf32> to vector<2x10xf32>
    %65 = arith.addf %62, %64 : vector<2x10xf32>
    %cst_39 = arith.constant dense<0xFF800000> : vector<2xf32>
    %66 = vector.multi_reduction <maximumf>, %65, %cst_39 [1] : vector<2x10xf32> to vector<2xf32>
    %67 = vector.shape_cast %66 : vector<2xf32> to vector<2x1xf32>
    %68 = vector.broadcast %67 : vector<2x1xf32> to vector<2x10xf32>
    %69 = arith.subf %65, %68 : vector<2x10xf32>
    %70 = math.exp %69 : vector<2x10xf32>
    %cst_40 = arith.constant dense<0.000000e+00> : vector<2xf32>
    %71 = vector.multi_reduction <add>, %70, %cst_40 [1] : vector<2x10xf32> to vector<2xf32>
    %72 = vector.shape_cast %71 : vector<2xf32> to vector<2x1xf32>
    %73 = tpu.reciprocal %72 : vector<2x1xf32> -> vector<2x1xf32>
    %74 = vector.broadcast %73 : vector<2x1xf32> to vector<2x10xf32>
    %75 = arith.mulf %70, %74 : vector<2x10xf32>
    %c0_41 = arith.constant 0 : index
    %c0_42 = arith.constant 0 : index
    %76 = vector.load %arg9[%c0_41, %c0_42] : memref<2x10xf32, #tpu.memory_space<vmem>>, vector<2x10xf32>
    tpu.vector_store %arg9[%c0_41, %c0_42], %75 {strides = array<i32>} : memref<2x10xf32, #tpu.memory_space<vmem>>, vector<2x10xf32>,
    return
  }
}

</mosaic_0001>

<llo_original>
// kernel: forward.1
$region0: #{forward.1}
  #allocation0 [shape = 'u32[]', space=smem, size = 0x4, offset = 0x4, fixed_abs, tag = 'smem constant byte address 0x4 - core index']
  #allocation1 [shape = 'u32[144,128]{1,0:T(1,128)}', space=vmem, size = 0x12000, scoped, tag = 'internal scratch']
  %s0 = inlined_call_operand.vmem [shape: f32[40,72], index: 0, kind: input, shape index: {}]
  %s1 = inlined_call_operand.vmem [shape: f32[3,72,128], index: 1, kind: input, shape index: {}]
  %s2 = inlined_call_operand.vmem [shape: f32[1,128], index: 2, kind: input, shape index: {}]
  %s3 = inlined_call_operand.vmem [shape: f32[3,128,128], index: 3, kind: input, shape index: {}]
  %s4 = inlined_call_operand.vmem [shape: f32[1,128], index: 4, kind: input, shape index: {}]
  %s5 = inlined_call_operand.vmem [shape: f32[8,10], index: 5, kind: input, shape index: {}]
  %s6 = inlined_call_operand.vmem [shape: f32[1,10], index: 6, kind: input, shape index: {}]
  %s7 = inlined_call_operand.vmem [shape: f32[38,1], index: 7, kind: input, shape index: {}]
  %s8 = inlined_call_operand.vmem [shape: f32[36,1], index: 8, kind: input, shape index: {}]
  %s9 = inlined_call_operand.hbm [shape: f32[2,10], index: 9, kind: output, shape index: {}]
  %s10 = sld [smem:[#allocation0]]
  $region46: #{forward.1} parent=0
    _
  %s12 = ssub.s32 1, %s10
  %s13 = scalar_select 0, %s12, %s10
  $region1: #{forward.1} parent=0
    #allocation2 [shape = 'u8[1024]{0}', space=vmem, size = 0x400, scoped, tag = 'output window, operand 0, single buffered']
    #allocation3 [shape = 's32[1]{0}', space=sflag, size = 0x4, scoped, tag = 'scoped memory for forward.1']
    %14 = vsyncpa [#allocation3], 0
    // Predicated region
    $region2: #{forward.1} parent=1 // pred_check
      _
    $region3: #{forward.1} parent=1 // pred_check_branch
      %16 = sbr.rel (0) target = $region5
    $region4: #{forward.1} parent=1 // pred_region
      _
    $region5: #{forward.1} parent=1 // pred_fallthru
      _
    // Predicated region
    $region6: #{forward.1} parent=1 // pred_check
      _
    $region7: #{forward.1} parent=1 // pred_check_branch
      %18 = sbr.rel (0) target = $region9
    $region8: #{forward.1} parent=1 // pred_region
      _
    $region9: #{forward.1} parent=1 // pred_fallthru
      _
    // Predicated region
    $region10: #{forward.1} parent=1 // pred_check
      _
    $region11: #{forward.1} parent=1 // pred_check_branch
      %20 = sbr.rel (0) target = $region13
    $region12: #{forward.1} parent=1 // pred_region
      _
    $region13: #{forward.1} parent=1 // pred_fallthru
      _
    // Predicated region
    $region14: #{forward.1} parent=1 // pred_check
      _
    $region15: #{forward.1} parent=1 // pred_check_branch
      %22 = sbr.rel (0) target = $region17
    $region16: #{forward.1} parent=1 // pred_region
      _
    $region17: #{forward.1} parent=1 // pred_fallthru
      _
    // Predicated region
    $region18: #{forward.1} parent=1 // pred_check
      _
    $region19: #{forward.1} parent=1 // pred_check_branch
      %24 = sbr.rel (0) target = $region21
    $region20: #{forward.1} parent=1 // pred_region
      _
    $region21: #{forward.1} parent=1 // pred_fallthru
      _
    // Predicated region
    $region22: #{forward.1} parent=1 // pred_check
      _
    $region23: #{forward.1} parent=1 // pred_check_branch
      %26 = sbr.rel (0) target = $region25
    $region24: #{forward.1} parent=1 // pred_region
      _
    $region25: #{forward.1} parent=1 // pred_fallthru
      _
    // Predicated region
    $region26: #{forward.1} parent=1 // pred_check
      _
    $region27: #{forward.1} parent=1 // pred_check_branch
      %28 = sbr.rel (0) target = $region29
    $region28: #{forward.1} parent=1 // pred_region
      _
    $region29: #{forward.1} parent=1 // pred_fallthru
      _
    // Predicated region
    $region30: #{forward.1} parent=1 // pred_check
      _
    $region31: #{forward.1} parent=1 // pred_check_branch
      %30 = sbr.rel (0) target = $region33
    $region32: #{forward.1} parent=1 // pred_region
      _
    $region33: #{forward.1} parent=1 // pred_fallthru
      _
    // Predicated region
    $region34: #{forward.1} parent=1 // pred_check
      _
    $region35: #{forward.1} parent=1 // pred_check_branch
      %32 = sbr.rel (0) target = $region37
    $region36: #{forward.1} parent=1 // pred_region
      _
    $region37: #{forward.1} parent=1 // pred_fallthru
      _
    %v33 = vld [vmem:[%s0] sm:$0xff]
    %v34 = vld [vmem:[%s0 + $0x8] sm:$0xff]
    %v35 = vld [vmem:[%s0 + $0x10] sm:$0xff]
    %v36 = vld [vmem:[%s0 + $0x18] sm:$0xff]
    %v37 = vld [vmem:[%s0 + $0x20] sm:$0xff]
    %v38 = vld [vmem:[%s1] sm:$0xff]
    %v39 = vld [vmem:[%s1 + $0x8] sm:$0xff]
    %v40 = vld [vmem:[%s1 + $0x10] sm:$0xff]
    %v41 = vld [vmem:[%s1 + $0x18] sm:$0xff]
    %v42 = vld [vmem:[%s1 + $0x20] sm:$0xff]
    %v43 = vld [vmem:[%s1 + $0x28] sm:$0xff]
    %v44 = vld [vmem:[%s1 + $0x30] sm:$0xff]
    %v45 = vld [vmem:[%s1 + $0x38] sm:$0xff]
    %v46 = vld [vmem:[%s1 + $0x40] sm:$0xff]
    %s47 = scalar_lea.vmem %s1, 72
    %v48 = vld [vmem:[%s47] sm:$0xff]
    %v49 = vld [vmem:[%s47 + $0x8] sm:$0xff]
    %v50 = vld [vmem:[%s47 + $0x10] sm:$0xff]
    %v51 = vld [vmem:[%s47 + $0x18] sm:$0xff]
    %v52 = vld [vmem:[%s47 + $0x20] sm:$0xff]
    %v53 = vld [vmem:[%s47 + $0x28] sm:$0xff]
    %v54 = vld [vmem:[%s47 + $0x30] sm:$0xff]
    %v55 = vld [vmem:[%s47 + $0x38] sm:$0xff]
    %v56 = vld [vmem:[%s47 + $0x40] sm:$0xff]
    %vm62 = vcmask 1046528
    %v63 = vrot.slane %v33, 1
    %v64 = vrot.slane %v34, 1
    %v65 = vsel %vm62, %v63, %v64
    %v66 = vrot.slane %v35, 1
    %v67 = vsel %vm62, %v64, %v66
    %v68 = vrot.slane %v36, 1
    %v69 = vsel %vm62, %v66, %v68
    %v70 = vrot.slane %v37, 1
    %v71 = vsel %vm62, %v68, %v70
    %vm72 = vcmask 588800
    %v73 = vsel %vm72, %v65, 0
    %v75 = vsel %vm72, %v67, 0
    %v77 = vsel %vm72, %v69, 0
    %v79 = vsel %vm72, %v71, 0
    %v81 = vsel %vm72, %v70, 0
    %83 = vmatprep.subr.mxu0 0.0
    %84 = vmatpush1.msra.mxu0 %v48
    %85 = vmatprep.subr.mxu0 0.0
    %86 = vmatpush1.msra.mxu0 %v49
    %87 = vmatprep.subr.mxu0 0.0
    %88 = vmatpush1.msra.mxu0 %v50
    %89 = vmatprep.subr.mxu0 0.0
    %90 = vmatpush1.msra.mxu0 %v51
    %91 = vmatprep.subr.mxu0 0.0
    %92 = vmatpush1.msra.mxu0 %v52
    %93 = vmatprep.subr.mxu0 0.0
    %94 = vmatpush1.msra.mxu0 %v53
    %95 = vmatprep.subr.mxu0 0.0
    %96 = vmatpush1.msra.mxu0 %v54
    %97 = vmatprep.subr.mxu0 0.0
    %98 = vmatpush1.msra.mxu0 %v55
    %99 = vmatprep.subr.mxu0 0.0
    %100 = vmatpush1.msra.mxu0 %v56
    %101 = vmatprep.subr.mxu0 0.0
    %102 = vmatpush1.msra.mxu0 0.0
    %103 = vmatprep.subr.mxu0 0.0
    %104 = vmatpush1.msra.mxu0 0.0
    %105 = vmatprep.subr.mxu0 0.0
    %106 = vmatpush1.msra.mxu0 0.0
    %107 = vmatprep.subr.mxu0 0.0
    %108 = vmatpush1.msra.mxu0 0.0
    %109 = vmatprep.subr.mxu0 0.0
    %110 = vmatpush1.msra.mxu0 0.0
    %111 = vmatprep.subr.mxu0 0.0
    %112 = vmatpush1.msra.mxu0 0.0
    %113 = vmatprep.subr.mxu0 0.0
    %114 = vmatpush1.msra.mxu0 0.0
    %115 = vmatprep.subr.mxu0 0.0
    %116 = vmatpush1.msra.mxu0 0.0
    %117 = vmatprep.subr.mxu0 0.0
    %118 = vmatpush1.msra.mxu0 0.0
    %119 = vmatprep.subr.mxu0 0.0
    %120 = vmatpush1.msra.mxu0 0.0
    %121 = vmatprep.subr.mxu0 0.0
    %122 = vmatpush1.msra.mxu0 0.0
    %123 = vmatprep.subr.mxu0 0.0
    %124 = vmatpush1.msra.mxu0 0.0
    %125 = vmatprep.subr.mxu0 0.0
    %126 = vmatpush1.msra.mxu0 0.0
    %127 = vmatprep.subr.mxu0 0.0
    %128 = vmatpush1.msra.mxu0 0.0
    %129 = vmatprep.subr.mxu0 0.0
    %130 = vmatpush1.msra.mxu0 0.0
    %131 = vmatprep.subr.mxu0 0.0
    %132 = vmatpush1.msra.mxu0 0.0
    %133 = vmatprep.subr.mxu0 0.0
    %134 = vmatpush1.msra.mxu0 0.0
    %135 = vmatprep.subr.mxu0 0.0
    %136 = vmatpush1.msra.mxu0 0.0
    %137 = vmatprep.subr.mxu0 0.0
    %138 = vmatpush1.msra.mxu0 0.0
    %139 = vmatprep.subr.mxu0 0.0
    %140 = vmatpush1.msra.mxu0 0.0
    %141 = vmatprep.subr.mxu0 0.0
    %142 = vmatpush1.msra.mxu0 0.0
    %143 = vmatprep.subr.mxu0 0.0
    %144 = vmatpush1.msra.mxu0 0.0
    %145 = vmatprep.subr.mxu0 0.0
    %146 = vmatpush1.msra.mxu0 0.0
    %147 = vmatprep.mubr.f32.mxu0 0.0
    %148 = vmatmul.mubr.f32.gmra.mrb[0].mxu0 %v73
    %v149 = vpop.f32.mrb[0].mxu0
    %v150 = vadd.f32 0.0, %v149
    %v151 = vpop.f32.mrb[0].mxu0
    %152 = vmatprep.mubr.f32.mxu0 0.0
    %153 = vmatmul.mubr.f32.gmra.mrb[0].mxu0 %v75
    %v154 = vpop.f32.mrb[0].mxu0
    %v155 = vadd.f32 0.0, %v154
    %v156 = vpop.f32.mrb[0].mxu0
    %157 = vmatprep.mubr.f32.mxu0 0.0
    %158 = vmatmul.mubr.f32.gmra.mrb[0].mxu0 %v77
    %v159 = vpop.f32.mrb[0].mxu0
    %v160 = vadd.f32 0.0, %v159
    %v161 = vpop.f32.mrb[0].mxu0
    %162 = vmatprep.mubr.f32.mxu0 0.0
    %163 = vmatmul.mubr.f32.gmra.mrb[0].mxu0 %v79
    %v164 = vpop.f32.mrb[0].mxu0
    %v165 = vadd.f32 0.0, %v164
    %v166 = vpop.f32.mrb[0].mxu0
    %167 = vmatprep.mubr.f32.mxu0 0.0
    %168 = vmatmul.mubr.f32.gmra.mrb[0].mxu0 %v81
    %v169 = vpop.f32.mrb[0].mxu0
    %v170 = vadd.f32 0.0, %v169
    %v171 = vpop.f32.mrb[0].mxu0
    %172 = vdwg.mxu0
    %v173 = vsel %vm72, %v33, 0
    %v175 = vsel %vm72, %v34, 0
    %v177 = vsel %vm72, %v35, 0
    %v179 = vsel %vm72, %v36, 0
    %v181 = vsel %vm72, %v37, 0
    %183 = vmatprep.subr.mxu0 0.0
    %184 = vmatpush1.msra.mxu0 %v38
    %185 = vmatprep.subr.mxu0 0.0
    %186 = vmatpush1.msra.mxu0 %v39
    %187 = vmatprep.subr.mxu0 0.0
    %188 = vmatpush1.msra.mxu0 %v40
    %189 = vmatprep.subr.mxu0 0.0
    %190 = vmatpush1.msra.mxu0 %v41
    %191 = vmatprep.subr.mxu0 0.0
    %192 = vmatpush1.msra.mxu0 %v42
    %193 = vmatprep.subr.mxu0 0.0
    %194 = vmatpush1.msra.mxu0 %v43
    %195 = vmatprep.subr.mxu0 0.0
    %196 = vmatpush1.msra.mxu0 %v44
    %197 = vmatprep.subr.mxu0 0.0
    %198 = vmatpush1.msra.mxu0 %v45
    %199 = vmatprep.subr.mxu0 0.0
    %200 = vmatpush1.msra.mxu0 %v46
    %201 = vmatprep.subr.mxu0 0.0
    %202 = vmatpush1.msra.mxu0 0.0
    %203 = vmatprep.subr.mxu0 0.0
    %204 = vmatpush1.msra.mxu0 0.0
    %205 = vmatprep.subr.mxu0 0.0
    %206 = vmatpush1.msra.mxu0 0.0
    %207 = vmatprep.subr.mxu0 0.0
    %208 = vmatpush1.msra.mxu0 0.0
    %209 = vmatprep.subr.mxu0 0.0
    %210 = vmatpush1.msra.mxu0 0.0
    %211 = vmatprep.subr.mxu0 0.0
    %212 = vmatpush1.msra.mxu0 0.0
    %213 = vmatprep.subr.mxu0 0.0
    %214 = vmatpush1.msra.mxu0 0.0
    %215 = vmatprep.subr.mxu0 0.0
    %216 = vmatpush1.msra.mxu0 0.0
    %217 = vmatprep.subr.mxu0 0.0
    %218 = vmatpush1.msra.mxu0 0.0
    %219 = vmatprep.subr.mxu0 0.0
    %220 = vmatpush1.msra.mxu0 0.0
    %221 = vmatprep.subr.mxu0 0.0
    %222 = vmatpush1.msra.mxu0 0.0
    %223 = vmatprep.subr.mxu0 0.0
    %224 = vmatpush1.msra.mxu0 0.0
    %225 = vmatprep.subr.mxu0 0.0
    %226 = vmatpush1.msra.mxu0 0.0
    %227 = vmatprep.subr.mxu0 0.0
    %228 = vmatpush1.msra.mxu0 0.0
    %229 = vmatprep.subr.mxu0 0.0
    %230 = vmatpush1.msra.mxu0 0.0
    %231 = vmatprep.subr.mxu0 0.0
    %232 = vmatpush1.msra.mxu0 0.0
    %233 = vmatprep.subr.mxu0 0.0
    %234 = vmatpush1.msra.mxu0 0.0
    %235 = vmatprep.subr.mxu0 0.0
    %236 = vmatpush1.msra.mxu0 0.0
    %237 = vmatprep.subr.mxu0 0.0
    %238 = vmatpush1.msra.mxu0 0.0
    %239 = vmatprep.subr.mxu0 0.0
    %240 = vmatpush1.msra.mxu0 0.0
    %241 = vmatprep.subr.mxu0 0.0
    %242 = vmatpush1.msra.mxu0 0.0
    %243 = vmatprep.subr.mxu0 0.0
    %244 = vmatpush1.msra.mxu0 0.0
    %245 = vmatprep.subr.mxu0 0.0
    %246 = vmatpush1.msra.mxu0 0.0
    %247 = vmatprep.mubr.f32.mxu0 0.0
    %248 = vmatmul.mubr.f32.gmra.mrb[0].mxu0 %v173
    %v249 = vpop.f32.mrb[0].mxu0
    %v250 = vadd.f32 %v150, %v249
    %v251 = vpop.f32.mrb[0].mxu0
    %252 = vmatprep.mubr.f32.mxu0 0.0
    %253 = vmatmul.mubr.f32.gmra.mrb[0].mxu0 %v175
    %v254 = vpop.f32.mrb[0].mxu0
    %v255 = vadd.f32 %v155, %v254
    %v256 = vpop.f32.mrb[0].mxu0
    %257 = vmatprep.mubr.f32.mxu0 0.0
    %258 = vmatmul.mubr.f32.gmra.mrb[0].mxu0 %v177
    %v259 = vpop.f32.mrb[0].mxu0
    %v260 = vadd.f32 %v160, %v259
    %v261 = vpop.f32.mrb[0].mxu0
    %262 = vmatprep.mubr.f32.mxu0 0.0
    %263 = vmatmul.mubr.f32.gmra.mrb[0].mxu0 %v179
    %v264 = vpop.f32.mrb[0].mxu0
    %v265 = vadd.f32 %v165, %v264
    %v266 = vpop.f32.mrb[0].mxu0
    %267 = vmatprep.mubr.f32.mxu0 0.0
    %268 = vmatmul.mubr.f32.gmra.mrb[0].mxu0 %v181
    %v269 = vpop.f32.mrb[0].mxu0
    %v270 = vadd.f32 %v170, %v269
    %v271 = vpop.f32.mrb[0].mxu0
    %272 = vdwg.mxu0
    %s273 = scalar_lea.vmem %s1, 144
    %v274 = vld [vmem:[%s273] sm:$0xff]
    %v275 = vld [vmem:[%s273 + $0x8] sm:$0xff]
    %v276 = vld [vmem:[%s273 + $0x10] sm:$0xff]
    %v277 = vld [vmem:[%s273 + $0x18] sm:$0xff]
    %v278 = vld [vmem:[%s273 + $0x20] sm:$0xff]
    %v279 = vld [vmem:[%s273 + $0x28] sm:$0xff]
    %v280 = vld [vmem:[%s273 + $0x30] sm:$0xff]
    %v281 = vld [vmem:[%s273 + $0x38] sm:$0xff]
    %v282 = vld [vmem:[%s273 + $0x40] sm:$0xff]
    %vm283 = vcmask 1045504
    %v284 = vrot.slane %v33, 2
    %v285 = vrot.slane %v34, 2
    %v286 = vsel %vm283, %v284, %v285
    %v287 = vrot.slane %v35, 2
    %v288 = vsel %vm283, %v285, %v287
    %v289 = vrot.slane %v36, 2
    %v290 = vsel %vm283, %v287, %v289
    %v291 = vrot.slane %v37, 2
    %v292 = vsel %vm283, %v289, %v291
    %v293 = vsel %vm72, %v286, 0
    %v295 = vsel %vm72, %v288, 0
    %v297 = vsel %vm72, %v290, 0
    %v299 = vsel %vm72, %v292, 0
    %v301 = vsel %vm72, %v291, 0
    %303 = vmatprep.subr.mxu0 0.0
    %304 = vmatpush1.msra.mxu0 %v274
    %305 = vmatprep.subr.mxu0 0.0
    %306 = vmatpush1.msra.mxu0 %v275
    %307 = vmatprep.subr.mxu0 0.0
    %308 = vmatpush1.msra.mxu0 %v276
    %309 = vmatprep.subr.mxu0 0.0
    %310 = vmatpush1.msra.mxu0 %v277
    %311 = vmatprep.subr.mxu0 0.0
    %312 = vmatpush1.msra.mxu0 %v278
    %313 = vmatprep.subr.mxu0 0.0
    %314 = vmatpush1.msra.mxu0 %v279
    %315 = vmatprep.subr.mxu0 0.0
    %316 = vmatpush1.msra.mxu0 %v280
    %317 = vmatprep.subr.mxu0 0.0
    %318 = vmatpush1.msra.mxu0 %v281
    %319 = vmatprep.subr.mxu0 0.0
    %320 = vmatpush1.msra.mxu0 %v282
    %321 = vmatprep.subr.mxu0 0.0
    %322 = vmatpush1.msra.mxu0 0.0
    %323 = vmatprep.subr.mxu0 0.0
    %324 = vmatpush1.msra.mxu0 0.0
    %325 = vmatprep.subr.mxu0 0.0
    %326 = vmatpush1.msra.mxu0 0.0
    %327 = vmatprep.subr.mxu0 0.0
    %328 = vmatpush1.msra.mxu0 0.0
    %329 = vmatprep.subr.mxu0 0.0
    %330 = vmatpush1.msra.mxu0 0.0
    %331 = vmatprep.subr.mxu0 0.0
    %332 = vmatpush1.msra.mxu0 0.0
    %333 = vmatprep.subr.mxu0 0.0
    %334 = vmatpush1.msra.mxu0 0.0
    %335 = vmatprep.subr.mxu0 0.0
    %336 = vmatpush1.msra.mxu0 0.0
    %337 = vmatprep.subr.mxu0 0.0
    %338 = vmatpush1.msra.mxu0 0.0
    %339 = vmatprep.subr.mxu0 0.0
    %340 = vmatpush1.msra.mxu0 0.0
    %341 = vmatprep.subr.mxu0 0.0
    %342 = vmatpush1.msra.mxu0 0.0
    %343 = vmatprep.subr.mxu0 0.0
    %344 = vmatpush1.msra.mxu0 0.0
    %345 = vmatprep.subr.mxu0 0.0
    %346 = vmatpush1.msra.mxu0 0.0
    %347 = vmatprep.subr.mxu0 0.0
    %348 = vmatpush1.msra.mxu0 0.0
    %349 = vmatprep.subr.mxu0 0.0
    %350 = vmatpush1.msra.mxu0 0.0
    %351 = vmatprep.subr.mxu0 0.0
    %352 = vmatpush1.msra.mxu0 0.0
    %353 = vmatprep.subr.mxu0 0.0
    %354 = vmatpush1.msra.mxu0 0.0
    %355 = vmatprep.subr.mxu0 0.0
    %356 = vmatpush1.msra.mxu0 0.0
    %357 = vmatprep.subr.mxu0 0.0
    %358 = vmatpush1.msra.mxu0 0.0
    %359 = vmatprep.subr.mxu0 0.0
    %360 = vmatpush1.msra.mxu0 0.0
    %361 = vmatprep.subr.mxu0 0.0
    %362 = vmatpush1.msra.mxu0 0.0
    %363 = vmatprep.subr.mxu0 0.0
    %364 = vmatpush1.msra.mxu0 0.0
    %365 = vmatprep.subr.mxu0 0.0
    %366 = vmatpush1.msra.mxu0 0.0
    %367 = vmatprep.mubr.f32.mxu0 0.0
    %368 = vmatmul.mubr.f32.gmra.mrb[0].mxu0 %v293
    %v369 = vpop.f32.mrb[0].mxu0
    %v370 = vadd.f32 0.0, %v369
    %v371 = vpop.f32.mrb[0].mxu0
    %372 = vmatprep.mubr.f32.mxu0 0.0
    %373 = vmatmul.mubr.f32.gmra.mrb[0].mxu0 %v295
    %v374 = vpop.f32.mrb[0].mxu0
    %v375 = vadd.f32 0.0, %v374
    %v376 = vpop.f32.mrb[0].mxu0
    %377 = vmatprep.mubr.f32.mxu0 0.0
    %378 = vmatmul.mubr.f32.gmra.mrb[0].mxu0 %v297
    %v379 = vpop.f32.mrb[0].mxu0
    %v380 = vadd.f32 0.0, %v379
    %v381 = vpop.f32.mrb[0].mxu0
    %382 = vmatprep.mubr.f32.mxu0 0.0
    %383 = vmatmul.mubr.f32.gmra.mrb[0].mxu0 %v299
    %v384 = vpop.f32.mrb[0].mxu0
    %v385 = vadd.f32 0.0, %v384
    %v386 = vpop.f32.mrb[0].mxu0
    %387 = vmatprep.mubr.f32.mxu0 0.0
    %388 = vmatmul.mubr.f32.gmra.mrb[0].mxu0 %v301
    %v389 = vpop.f32.mrb[0].mxu0
    %v390 = vadd.f32 0.0, %v389
    %v391 = vpop.f32.mrb[0].mxu0
    %392 = vdwg.mxu0
    %v393 = vadd.f32 %v250, %v370
    %v394 = vadd.f32 %v255, %v375
    %v395 = vadd.f32 %v260, %v380
    %v396 = vadd.f32 %v265, %v385
    %v397 = vadd.f32 %v270, %v390
    %v398 = vld [vmem:[%s2] sm:$0x1]
    %v400 = vlaneseq
    %v401 = vshrl.u32 %v400, 7
    %v402 = vsub.s32 0, %v401
    %v403 = vrot.slane %v398, %v402
    %v405 = vadd.f32 %v393, %v403
    %v406 = vadd.f32 %v394, %v403
    %v407 = vadd.f32 %v395, %v403
    %v408 = vadd.f32 %v396, %v403
    %v409 = vadd.f32 %v397, %v403
    %v410 = vmax.f32 %v405, 0.0
    %v411 = vmax.f32 %v406, 0.0
    %v412 = vmax.f32 %v407, 0.0
    %v413 = vmax.f32 %v408, 0.0
    %v414 = vmax.f32 %v409, 0.0
    %v415 = vld [vmem:[%s7] sm:$0xff]
    %v416 = vld [vmem:[%s7 + $0x8] sm:$0xff]
    %v417 = vld [vmem:[%s7 + $0x10] sm:$0xff]
    %v418 = vld [vmem:[%s7 + $0x18] sm:$0xff]
    %v419 = vld [vmem:[%s7 + $0x20] sm:$0x3f]
    %421 = vset.pattern.permute.xlu0 0
    %422 = vperm.xlu0 %421, %v415
    %v423 = vpop.permute.xlu0 %422
    %426 = vset.pattern.permute.xlu0 0
    %427 = vperm.xlu0 %426, %v416
    %v428 = vpop.permute.xlu0 %427
    %431 = vset.pattern.permute.xlu0 0
    %432 = vperm.xlu0 %431, %v417
    %v433 = vpop.permute.xlu0 %432
    %436 = vset.pattern.permute.xlu0 0
    %437 = vperm.xlu0 %436, %v418
    %v438 = vpop.permute.xlu0 %437
    %441 = vset.pattern.permute.xlu0 0
    %442 = vperm.xlu0 %441, %v419
    %v443 = vpop.permute.xlu0 %442
    %v445 = vmul.f32 %v410, %v423
    %v446 = vmul.f32 %v411, %v428
    %v447 = vmul.f32 %v412, %v433
    %v448 = vmul.f32 %v413, %v438
    %v449 = vmul.f32 %v414, %v443
    %v450 = vld [vmem:[%s3] sm:$0xff]
    %v451 = vld [vmem:[%s3 + $0x8] sm:$0xff]
    %v452 = vld [vmem:[%s3 + $0x10] sm:$0xff]
    %v453 = vld [vmem:[%s3 + $0x18] sm:$0xff]
    %v454 = vld [vmem:[%s3 + $0x20] sm:$0xff]
    %v455 = vld [vmem:[%s3 + $0x28] sm:$0xff]
    %v456 = vld [vmem:[%s3 + $0x30] sm:$0xff]
    %v457 = vld [vmem:[%s3 + $0x38] sm:$0xff]
    %v458 = vld [vmem:[%s3 + $0x40] sm:$0xff]
    %v459 = vld [vmem:[%s3 + $0x48] sm:$0xff]
    %v460 = vld [vmem:[%s3 + $0x50] sm:$0xff]
    %v461 = vld [vmem:[%s3 + $0x58] sm:$0xff]
    %v462 = vld [vmem:[%s3 + $0x60] sm:$0xff]
    %v463 = vld [vmem:[%s3 + $0x68] sm:$0xff]
    %v464 = vld [vmem:[%s3 + $0x70] sm:$0xff]
    %v465 = vld [vmem:[%s3 + $0x78] sm:$0xff]
    %s466 = scalar_lea.vmem %s3, 128
    %v467 = vld [vmem:[%s466] sm:$0xff]
    %v468 = vld [vmem:[%s466 + $0x8] sm:$0xff]
    %v469 = vld [vmem:[%s466 + $0x10] sm:$0xff]
    %v470 = vld [vmem:[%s466 + $0x18] sm:$0xff]
    %v471 = vld [vmem:[%s466 + $0x20] sm:$0xff]
    %v472 = vld [vmem:[%s466 + $0x28] sm:$0xff]
    %v473 = vld [vmem:[%s466 + $0x30] sm:$0xff]
    %v474 = vld [vmem:[%s466 + $0x38] sm:$0xff]
    %v475 = vld [vmem:[%s466 + $0x40] sm:$0xff]
    %v476 = vld [vmem:[%s466 + $0x48] sm:$0xff]
    %v477 = vld [vmem:[%s466 + $0x50] sm:$0xff]
    %v478 = vld [vmem:[%s466 + $0x58] sm:$0xff]
    %v479 = vld [vmem:[%s466 + $0x60] sm:$0xff]
    %v480 = vld [vmem:[%s466 + $0x68] sm:$0xff]
    %v481 = vld [vmem:[%s466 + $0x70] sm:$0xff]
    %v482 = vld [vmem:[%s466 + $0x78] sm:$0xff]
    %v488 = vrot.slane %v445, 1
    %v489 = vrot.slane %v446, 1
    %v490 = vsel %vm62, %v488, %v489
    %v491 = vrot.slane %v447, 1
    %v492 = vsel %vm62, %v489, %v491
    %v493 = vrot.slane %v448, 1
    %v494 = vsel %vm62, %v491, %v493
    %v495 = vrot.slane %v449, 1
    %v496 = vsel %vm62, %v493, %v495
    %502 = vmatprep.subr.mxu0 0.0
    %503 = vmatpush1.msra.mxu0 %v467
    %504 = vmatprep.subr.mxu0 0.0
    %505 = vmatpush1.msra.mxu0 %v468
    %506 = vmatprep.subr.mxu0 0.0
    %507 = vmatpush1.msra.mxu0 %v469
    %508 = vmatprep.subr.mxu0 0.0
    %509 = vmatpush1.msra.mxu0 %v470
    %510 = vmatprep.subr.mxu0 0.0
    %511 = vmatpush1.msra.mxu0 %v471
    %512 = vmatprep.subr.mxu0 0.0
    %513 = vmatpush1.msra.mxu0 %v472
    %514 = vmatprep.subr.mxu0 0.0
    %515 = vmatpush1.msra.mxu0 %v473
    %516 = vmatprep.subr.mxu0 0.0
    %517 = vmatpush1.msra.mxu0 %v474
    %518 = vmatprep.subr.mxu0 0.0
    %519 = vmatpush1.msra.mxu0 %v475
    %520 = vmatprep.subr.mxu0 0.0
    %521 = vmatpush1.msra.mxu0 %v476
    %522 = vmatprep.subr.mxu0 0.0
    %523 = vmatpush1.msra.mxu0 %v477
    %524 = vmatprep.subr.mxu0 0.0
    %525 = vmatpush1.msra.mxu0 %v478
    %526 = vmatprep.subr.mxu0 0.0
    %527 = vmatpush1.msra.mxu0 %v479
    %528 = vmatprep.subr.mxu0 0.0
    %529 = vmatpush1.msra.mxu0 %v480
    %530 = vmatprep.subr.mxu0 0.0
    %531 = vmatpush1.msra.mxu0 %v481
    %532 = vmatprep.subr.mxu0 0.0
    %533 = vmatpush1.msra.mxu0 %v482
    %534 = vmatprep.subr.mxu0 0.0
    %535 = vmatpush1.msra.mxu0 0.0
    %536 = vmatprep.subr.mxu0 0.0
    %537 = vmatpush1.msra.mxu0 0.0
    %538 = vmatprep.subr.mxu0 0.0
    %539 = vmatpush1.msra.mxu0 0.0
    %540 = vmatprep.subr.mxu0 0.0
    %541 = vmatpush1.msra.mxu0 0.0
    %542 = vmatprep.subr.mxu0 0.0
    %543 = vmatpush1.msra.mxu0 0.0
    %544 = vmatprep.subr.mxu0 0.0
    %545 = vmatpush1.msra.mxu0 0.0
    %546 = vmatprep.subr.mxu0 0.0
    %547 = vmatpush1.msra.mxu0 0.0
    %548 = vmatprep.subr.mxu0 0.0
    %549 = vmatpush1.msra.mxu0 0.0
    %550 = vmatprep.subr.mxu0 0.0
    %551 = vmatpush1.msra.mxu0 0.0
    %552 = vmatprep.subr.mxu0 0.0
    %553 = vmatpush1.msra.mxu0 0.0
    %554 = vmatprep.subr.mxu0 0.0
    %555 = vmatpush1.msra.mxu0 0.0
    %556 = vmatprep.subr.mxu0 0.0
    %557 = vmatpush1.msra.mxu0 0.0
    %558 = vmatprep.subr.mxu0 0.0
    %559 = vmatpush1.msra.mxu0 0.0
    %560 = vmatprep.subr.mxu0 0.0
    %561 = vmatpush1.msra.mxu0 0.0
    %562 = vmatprep.subr.mxu0 0.0
    %563 = vmatpush1.msra.mxu0 0.0
    %564 = vmatprep.subr.mxu0 0.0
    %565 = vmatpush1.msra.mxu0 0.0
    %566 = vmatprep.mubr.f32.mxu0 0.0
    %567 = vmatmul.mubr.f32.gmra.mrb[0].mxu0 %v490
    %v568 = vpop.f32.mrb[0].mxu0
    %v569 = vadd.f32 0.0, %v568
    %v570 = vpop.f32.mrb[0].mxu0
    %571 = vmatprep.mubr.f32.mxu0 0.0
    %572 = vmatmul.mubr.f32.gmra.mrb[0].mxu0 %v492
    %v573 = vpop.f32.mrb[0].mxu0
    %v574 = vadd.f32 0.0, %v573
    %v575 = vpop.f32.mrb[0].mxu0
    %576 = vmatprep.mubr.f32.mxu0 0.0
    %577 = vmatmul.mubr.f32.gmra.mrb[0].mxu0 %v494
    %v578 = vpop.f32.mrb[0].mxu0
    %v579 = vadd.f32 0.0, %v578
    %v580 = vpop.f32.mrb[0].mxu0
    %581 = vmatprep.mubr.f32.mxu0 0.0
    %582 = vmatmul.mubr.f32.gmra.mrb[0].mxu0 %v496
    %v583 = vpop.f32.mrb[0].mxu0
    %v584 = vadd.f32 0.0, %v583
    %v585 = vpop.f32.mrb[0].mxu0
    %586 = vmatprep.mubr.f32.mxu0 0.0
    %587 = vmatmul.mubr.f32.gmra.mrb[0].mxu0 %v495
    %v588 = vpop.f32.mrb[0].mxu0
    %v589 = vadd.f32 0.0, %v588
    %v590 = vpop.f32.mrb[0].mxu0
    %591 = vdwg.mxu0
    %592 = vmatprep.subr.mxu0 0.0
    %593 = vmatpush1.msra.mxu0 %v450
    %594 = vmatprep.subr.mxu0 0.0
    %595 = vmatpush1.msra.mxu0 %v451
    %596 = vmatprep.subr.mxu0 0.0
    %597 = vmatpush1.msra.mxu0 %v452
    %598 = vmatprep.subr.mxu0 0.0
    %599 = vmatpush1.msra.mxu0 %v453
    %600 = vmatprep.subr.mxu0 0.0
    %601 = vmatpush1.msra.mxu0 %v454
    %602 = vmatprep.subr.mxu0 0.0
    %603 = vmatpush1.msra.mxu0 %v455
    %604 = vmatprep.subr.mxu0 0.0
    %605 = vmatpush1.msra.mxu0 %v456
    %606 = vmatprep.subr.mxu0 0.0
    %607 = vmatpush1.msra.mxu0 %v457
    %608 = vmatprep.subr.mxu0 0.0
    %609 = vmatpush1.msra.mxu0 %v458
    %610 = vmatprep.subr.mxu0 0.0
    %611 = vmatpush1.msra.mxu0 %v459
    %612 = vmatprep.subr.mxu0 0.0
    %613 = vmatpush1.msra.mxu0 %v460
    %614 = vmatprep.subr.mxu0 0.0
    %615 = vmatpush1.msra.mxu0 %v461
    %616 = vmatprep.subr.mxu0 0.0
    %617 = vmatpush1.msra.mxu0 %v462
    %618 = vmatprep.subr.mxu0 0.0
    %619 = vmatpush1.msra.mxu0 %v463
    %620 = vmatprep.subr.mxu0 0.0
    %621 = vmatpush1.msra.mxu0 %v464
    %622 = vmatprep.subr.mxu0 0.0
    %623 = vmatpush1.msra.mxu0 %v465
    %624 = vmatprep.subr.mxu0 0.0
    %625 = vmatpush1.msra.mxu0 0.0
    %626 = vmatprep.subr.mxu0 0.0
    %627 = vmatpush1.msra.mxu0 0.0
    %628 = vmatprep.subr.mxu0 0.0
    %629 = vmatpush1.msra.mxu0 0.0
    %630 = vmatprep.subr.mxu0 0.0
    %631 = vmatpush1.msra.mxu0 0.0
    %632 = vmatprep.subr.mxu0 0.0
    %633 = vmatpush1.msra.mxu0 0.0
    %634 = vmatprep.subr.mxu0 0.0
    %635 = vmatpush1.msra.mxu0 0.0
    %636 = vmatprep.subr.mxu0 0.0
    %637 = vmatpush1.msra.mxu0 0.0
    %638 = vmatprep.subr.mxu0 0.0
    %639 = vmatpush1.msra.mxu0 0.0
    %640 = vmatprep.subr.mxu0 0.0
    %641 = vmatpush1.msra.mxu0 0.0
    %642 = vmatprep.subr.mxu0 0.0
    %643 = vmatpush1.msra.mxu0 0.0
    %644 = vmatprep.subr.mxu0 0.0
    %645 = vmatpush1.msra.mxu0 0.0
    %646 = vmatprep.subr.mxu0 0.0
    %647 = vmatpush1.msra.mxu0 0.0
    %648 = vmatprep.subr.mxu0 0.0
    %649 = vmatpush1.msra.mxu0 0.0
    %650 = vmatprep.subr.mxu0 0.0
    %651 = vmatpush1.msra.mxu0 0.0
    %652 = vmatprep.subr.mxu0 0.0
    %653 = vmatpush1.msra.mxu0 0.0
    %654 = vmatprep.subr.mxu0 0.0
    %655 = vmatpush1.msra.mxu0 0.0
    %656 = vmatprep.mubr.f32.mxu0 0.0
    %657 = vmatmul.mubr.f32.gmra.mrb[0].mxu0 %v445
    %v658 = vpop.f32.mrb[0].mxu0
    %v659 = vadd.f32 %v569, %v658
    %v660 = vpop.f32.mrb[0].mxu0
    %661 = vmatprep.mubr.f32.mxu0 0.0
    %662 = vmatmul.mubr.f32.gmra.mrb[0].mxu0 %v446
    %v663 = vpop.f32.mrb[0].mxu0
    %v664 = vadd.f32 %v574, %v663
    %v665 = vpop.f32.mrb[0].mxu0
    %666 = vmatprep.mubr.f32.mxu0 0.0
    %667 = vmatmul.mubr.f32.gmra.mrb[0].mxu0 %v447
    %v668 = vpop.f32.mrb[0].mxu0
    %v669 = vadd.f32 %v579, %v668
    %v670 = vpop.f32.mrb[0].mxu0
    %671 = vmatprep.mubr.f32.mxu0 0.0
    %672 = vmatmul.mubr.f32.gmra.mrb[0].mxu0 %v448
    %v673 = vpop.f32.mrb[0].mxu0
    %v674 = vadd.f32 %v584, %v673
    %v675 = vpop.f32.mrb[0].mxu0
    %676 = vmatprep.mubr.f32.mxu0 0.0
    %677 = vmatmul.mubr.f32.gmra.mrb[0].mxu0 %v449
    %v678 = vpop.f32.mrb[0].mxu0
    %v679 = vadd.f32 %v589, %v678
    %v680 = vpop.f32.mrb[0].mxu0
    %681 = vdwg.mxu0
    %s682 = scalar_lea.vmem %s3, 256
    %v683 = vld [vmem:[%s682] sm:$0xff]
    %v684 = vld [vmem:[%s682 + $0x8] sm:$0xff]
    %v685 = vld [vmem:[%s682 + $0x10] sm:$0xff]
    %v686 = vld [vmem:[%s682 + $0x18] sm:$0xff]
    %v687 = vld [vmem:[%s682 + $0x20] sm:$0xff]
    %v688 = vld [vmem:[%s682 + $0x28] sm:$0xff]
    %v689 = vld [vmem:[%s682 + $0x30] sm:$0xff]
    %v690 = vld [vmem:[%s682 + $0x38] sm:$0xff]
    %v691 = vld [vmem:[%s682 + $0x40] sm:$0xff]
    %v692 = vld [vmem:[%s682 + $0x48] sm:$0xff]
    %v693 = vld [vmem:[%s682 + $0x50] sm:$0xff]
    %v694 = vld [vmem:[%s682 + $0x58] sm:$0xff]
    %v695 = vld [vmem:[%s682 + $0x60] sm:$0xff]
    %v696 = vld [vmem:[%s682 + $0x68] sm:$0xff]
    %v697 = vld [vmem:[%s682 + $0x70] sm:$0xff]
    %v698 = vld [vmem:[%s682 + $0x78] sm:$0xff]
    %v699 = vrot.slane %v445, 2
    %v700 = vrot.slane %v446, 2
    %v701 = vsel %vm283, %v699, %v700
    %v702 = vrot.slane %v447, 2
    %v703 = vsel %vm283, %v700, %v702
    %v704 = vrot.slane %v448, 2
    %v705 = vsel %vm283, %v702, %v704
    %v706 = vrot.slane %v449, 2
    %v707 = vsel %vm283, %v704, %v706
    %713 = vmatprep.subr.mxu0 0.0
    %714 = vmatpush1.msra.mxu0 %v683
    %715 = vmatprep.subr.mxu0 0.0
    %716 = vmatpush1.msra.mxu0 %v684
    %717 = vmatprep.subr.mxu0 0.0
    %718 = vmatpush1.msra.mxu0 %v685
    %719 = vmatprep.subr.mxu0 0.0
    %720 = vmatpush1.msra.mxu0 %v686
    %721 = vmatprep.subr.mxu0 0.0
    %722 = vmatpush1.msra.mxu0 %v687
    %723 = vmatprep.subr.mxu0 0.0
    %724 = vmatpush1.msra.mxu0 %v688
    %725 = vmatprep.subr.mxu0 0.0
    %726 = vmatpush1.msra.mxu0 %v689
    %727 = vmatprep.subr.mxu0 0.0
    %728 = vmatpush1.msra.mxu0 %v690
    %729 = vmatprep.subr.mxu0 0.0
    %730 = vmatpush1.msra.mxu0 %v691
    %731 = vmatprep.subr.mxu0 0.0
    %732 = vmatpush1.msra.mxu0 %v692
    %733 = vmatprep.subr.mxu0 0.0
    %734 = vmatpush1.msra.mxu0 %v693
    %735 = vmatprep.subr.mxu0 0.0
    %736 = vmatpush1.msra.mxu0 %v694
    %737 = vmatprep.subr.mxu0 0.0
    %738 = vmatpush1.msra.mxu0 %v695
    %739 = vmatprep.subr.mxu0 0.0
    %740 = vmatpush1.msra.mxu0 %v696
    %741 = vmatprep.subr.mxu0 0.0
    %742 = vmatpush1.msra.mxu0 %v697
    %743 = vmatprep.subr.mxu0 0.0
    %744 = vmatpush1.msra.mxu0 %v698
    %745 = vmatprep.subr.mxu0 0.0
    %746 = vmatpush1.msra.mxu0 0.0
    %747 = vmatprep.subr.mxu0 0.0
    %748 = vmatpush1.msra.mxu0 0.0
    %749 = vmatprep.subr.mxu0 0.0
    %750 = vmatpush1.msra.mxu0 0.0
    %751 = vmatprep.subr.mxu0 0.0
    %752 = vmatpush1.msra.mxu0 0.0
    %753 = vmatprep.subr.mxu0 0.0
    %754 = vmatpush1.msra.mxu0 0.0
    %755 = vmatprep.subr.mxu0 0.0
    %756 = vmatpush1.msra.mxu0 0.0
    %757 = vmatprep.subr.mxu0 0.0
    %758 = vmatpush1.msra.mxu0 0.0
    %759 = vmatprep.subr.mxu0 0.0
    %760 = vmatpush1.msra.mxu0 0.0
    %761 = vmatprep.subr.mxu0 0.0
    %762 = vmatpush1.msra.mxu0 0.0
    %763 = vmatprep.subr.mxu0 0.0
    %764 = vmatpush1.msra.mxu0 0.0
    %765 = vmatprep.subr.mxu0 0.0
    %766 = vmatpush1.msra.mxu0 0.0
    %767 = vmatprep.subr.mxu0 0.0
    %768 = vmatpush1.msra.mxu0 0.0
    %769 = vmatprep.subr.mxu0 0.0
    %770 = vmatpush1.msra.mxu0 0.0
    %771 = vmatprep.subr.mxu0 0.0
    %772 = vmatpush1.msra.mxu0 0.0
    %773 = vmatprep.subr.mxu0 0.0
    %774 = vmatpush1.msra.mxu0 0.0
    %775 = vmatprep.subr.mxu0 0.0
    %776 = vmatpush1.msra.mxu0 0.0
    %777 = vmatprep.mubr.f32.mxu0 0.0
    %778 = vmatmul.mubr.f32.gmra.mrb[0].mxu0 %v701
    %v779 = vpop.f32.mrb[0].mxu0
    %v780 = vadd.f32 0.0, %v779
    %v781 = vpop.f32.mrb[0].mxu0
    %782 = vmatprep.mubr.f32.mxu0 0.0
    %783 = vmatmul.mubr.f32.gmra.mrb[0].mxu0 %v703
    %v784 = vpop.f32.mrb[0].mxu0
    %v785 = vadd.f32 0.0, %v784
    %v786 = vpop.f32.mrb[0].mxu0
    %787 = vmatprep.mubr.f32.mxu0 0.0
    %788 = vmatmul.mubr.f32.gmra.mrb[0].mxu0 %v705
    %v789 = vpop.f32.mrb[0].mxu0
    %v790 = vadd.f32 0.0, %v789
    %v791 = vpop.f32.mrb[0].mxu0
    %792 = vmatprep.mubr.f32.mxu0 0.0
    %793 = vmatmul.mubr.f32.gmra.mrb[0].mxu0 %v707
    %v794 = vpop.f32.mrb[0].mxu0
    %v795 = vadd.f32 0.0, %v794
    %v796 = vpop.f32.mrb[0].mxu0
    %797 = vmatprep.mubr.f32.mxu0 0.0
    %798 = vmatmul.mubr.f32.gmra.mrb[0].mxu0 %v706
    %v799 = vpop.f32.mrb[0].mxu0
    %v800 = vadd.f32 0.0, %v799
    %v801 = vpop.f32.mrb[0].mxu0
    %802 = vdwg.mxu0
    %v803 = vadd.f32 %v659, %v780
    %v804 = vadd.f32 %v664, %v785
    %v805 = vadd.f32 %v669, %v790
    %v806 = vadd.f32 %v674, %v795
    %v807 = vadd.f32 %v679, %v800
    %v808 = vld [vmem:[%s4] sm:$0x1]
    %v810 = vlaneseq
    %v811 = vshrl.u32 %v810, 7
    %v812 = vsub.s32 0, %v811
    %v813 = vrot.slane %v808, %v812
    %v815 = vadd.f32 %v803, %v813
    %v816 = vadd.f32 %v804, %v813
    %v817 = vadd.f32 %v805, %v813
    %v818 = vadd.f32 %v806, %v813
    %v819 = vadd.f32 %v807, %v813
    %v820 = vmax.f32 %v815, 0.0
    %v821 = vmax.f32 %v816, 0.0
    %v822 = vmax.f32 %v817, 0.0
    %v823 = vmax.f32 %v818, 0.0
    %v824 = vmax.f32 %v819, 0.0
    %v825 = vld [vmem:[%s8] sm:$0xff]
    %v826 = vld [vmem:[%s8 + $0x8] sm:$0xff]
    %v827 = vld [vmem:[%s8 + $0x10] sm:$0xff]
    %v828 = vld [vmem:[%s8 + $0x18] sm:$0xff]
    %v829 = vld [vmem:[%s8 + $0x20] sm:$0xf]
    %831 = vset.pattern.permute.xlu0 0
    %832 = vperm.xlu0 %831, %v825
    %v833 = vpop.permute.xlu0 %832
    %836 = vset.pattern.permute.xlu0 0
    %837 = vperm.xlu0 %836, %v826
    %v838 = vpop.permute.xlu0 %837
    %841 = vset.pattern.permute.xlu0 0
    %842 = vperm.xlu0 %841, %v827
    %v843 = vpop.permute.xlu0 %842
    %846 = vset.pattern.permute.xlu0 0
    %847 = vperm.xlu0 %846, %v828
    %v848 = vpop.permute.xlu0 %847
    %851 = vset.pattern.permute.xlu0 0
    %852 = vperm.xlu0 %851, %v829
    %v853 = vpop.permute.xlu0 %852
    %v855 = vmul.f32 %v820, %v833
    %v856 = vmul.f32 %v821, %v838
    %v857 = vmul.f32 %v822, %v843
    %v858 = vmul.f32 %v823, %v848
    %v859 = vmul.f32 %v824, %v853
    %vm860 = vcmask 1041408
    %v861 = vsel %vm860, %v857, -inf
    %v862 = vmax.f32 %v855, %v856
    %v863 = vmax.f32 %v862, %v861
    %v864 = vrot.slane %v863, 4
    %v865 = vmax.f32 %v863, %v864
    %v866 = vrot.slane %v865, 2
    %v867 = vmax.f32 %v865, %v866
    %v868 = vrot.slane %v867, 1
    %v869 = vmax.f32 %v867, %v868
    %vm870 = vcmask 1047554
    %v871 = vsel %vm870, %v857, -inf
    %vm872 = vcmask 1043456
    %v873 = vsel %vm872, %v859, -inf
    %v874 = vmax.f32 %v871, %v858
    %v875 = vmax.f32 %v874, %v873
    %v876 = vrot.slane %v875, 4
    %v877 = vmax.f32 %v875, %v876
    %v878 = vrot.slane %v877, 2
    %v879 = vmax.f32 %v877, %v878
    %v880 = vrot.slane %v879, 1
    %v881 = vmax.f32 %v879, %v880
    %vm882 = vcmask 1040384
    %v883 = vsel %vm882, %v869, %v881
    %884 = vrot.lane.b32.xlu0 %v883, 8
    %v885 = vpop.permute.xlu0 %884
    %v886 = vmax.f32 %v883, %v885
    %887 = vrot.lane.b32.xlu0 %v886, 16
    %v888 = vpop.permute.xlu0 %887
    %v889 = vmax.f32 %v886, %v888
    %890 = vrot.lane.b32.xlu0 %v889, 32
    %v891 = vpop.permute.xlu0 %890
    %v892 = vmax.f32 %v889, %v891
    %893 = vrot.lane.b32.xlu0 %v892, 64
    %v894 = vpop.permute.xlu0 %893
    %v895 = vmax.f32 %v892, %v894
    %v896 = vld [vmem:[%s5] sm:$0xff]
    %v897 = vld [vmem:[%s6] sm:$0x1]
    %v899 = vlaneseq
    %v900 = vshrl.u32 %v899, 7
    %v901 = vsub.s32 0, %v900
    %v902 = vrot.slane %v897, %v901
    %vm904 = vcmask 64512
    %v906 = vsel %vm904, %v895, 0
    %908 = vmatprep.subr.mxu0 0.0
    %909 = vmatpush1.msra.mxu0 %v896
    %910 = vmatprep.subr.mxu0 0.0
    %911 = vmatpush1.msra.mxu0 0.0
    %912 = vmatprep.subr.mxu0 0.0
    %913 = vmatpush1.msra.mxu0 0.0
    %914 = vmatprep.subr.mxu0 0.0
    %915 = vmatpush1.msra.mxu0 0.0
    %916 = vmatprep.subr.mxu0 0.0
    %917 = vmatpush1.msra.mxu0 0.0
    %918 = vmatprep.subr.mxu0 0.0
    %919 = vmatpush1.msra.mxu0 0.0
    %920 = vmatprep.subr.mxu0 0.0
    %921 = vmatpush1.msra.mxu0 0.0
    %922 = vmatprep.subr.mxu0 0.0
    %923 = vmatpush1.msra.mxu0 0.0
    %924 = vmatprep.subr.mxu0 0.0
    %925 = vmatpush1.msra.mxu0 0.0
    %926 = vmatprep.subr.mxu0 0.0
    %927 = vmatpush1.msra.mxu0 0.0
    %928 = vmatprep.subr.mxu0 0.0
    %929 = vmatpush1.msra.mxu0 0.0
    %930 = vmatprep.subr.mxu0 0.0
    %931 = vmatpush1.msra.mxu0 0.0
    %932 = vmatprep.subr.mxu0 0.0
    %933 = vmatpush1.msra.mxu0 0.0
    %934 = vmatprep.subr.mxu0 0.0
    %935 = vmatpush1.msra.mxu0 0.0
    %936 = vmatprep.subr.mxu0 0.0
    %937 = vmatpush1.msra.mxu0 0.0
    %938 = vmatprep.subr.mxu0 0.0
    %939 = vmatpush1.msra.mxu0 0.0
    %940 = vmatprep.subr.mxu0 0.0
    %941 = vmatpush1.msra.mxu0 0.0
    %942 = vmatprep.subr.mxu0 0.0
    %943 = vmatpush1.msra.mxu0 0.0
    %944 = vmatprep.subr.mxu0 0.0
    %945 = vmatpush1.msra.mxu0 0.0
    %946 = vmatprep.subr.mxu0 0.0
    %947 = vmatpush1.msra.mxu0 0.0
    %948 = vmatprep.subr.mxu0 0.0
    %949 = vmatpush1.msra.mxu0 0.0
    %950 = vmatprep.subr.mxu0 0.0
    %951 = vmatpush1.msra.mxu0 0.0
    %952 = vmatprep.subr.mxu0 0.0
    %953 = vmatpush1.msra.mxu0 0.0
    %954 = vmatprep.subr.mxu0 0.0
    %955 = vmatpush1.msra.mxu0 0.0
    %956 = vmatprep.subr.mxu0 0.0
    %957 = vmatpush1.msra.mxu0 0.0
    %958 = vmatprep.subr.mxu0 0.0
    %959 = vmatpush1.msra.mxu0 0.0
    %960 = vmatprep.subr.mxu0 0.0
    %961 = vmatpush1.msra.mxu0 0.0
    %962 = vmatprep.subr.mxu0 0.0
    %963 = vmatpush1.msra.mxu0 0.0
    %964 = vmatprep.subr.mxu0 0.0
    %965 = vmatpush1.msra.mxu0 0.0
    %966 = vmatprep.subr.mxu0 0.0
    %967 = vmatpush1.msra.mxu0 0.0
    %968 = vmatprep.subr.mxu0 0.0
    %969 = vmatpush1.msra.mxu0 0.0
    %970 = vmatprep.subr.mxu0 0.0
    %971 = vmatpush1.msra.mxu0 0.0
    %972 = vmatprep.mubr.f32.mxu0 0.0
    %973 = vmatmul.mubr.f32.gmra.mrb[0].mxu0 %v906
    %v974 = vpop.f32.mrb[0].mxu0
    %v975 = vadd.f32 %v902, %v974
    %v976 = vpop.f32.mrb[0].mxu0
    %977 = vdwg.mxu0
    %vm978 = vcmask 74752
    %v979 = vsel %vm978, %v975, -inf
    %980 = vmax.xlane.f32.xlu0 %v979
    %v981 = vpop.xlane.xlu0 %980
    %v982 = vsub.f32 %v975, %v981
    %v983 = vmul.f32 %v982, 1.442695
    %v984 = vpow.pop %v983
    %v985 = vsel %vm978, %v984, 0.0
    %986 = vadd.xlane.f32.xlu0 %v985
    %v987 = vpop.xlane.xlu0 %986
    %v988 = vrcp.pop %v987
    %v989 = vmul.f32 %v984, %v988
    %990 = vst.msk [vmem:[#allocation2] sm:$0x3] %vm978, %v989
    // Predicated region
    $region38: #{forward.1} parent=1 // pred_check
      _
    $region39: #{forward.1} parent=1 // pred_check_branch
      %992 = sbr.rel (0) target = $region41
    $region40: #{forward.1} parent=1 // pred_region
      %s994 = ssub.s32 32, 32
      %995 = vsyncadd [#allocation3], %s994
      %s997 = sshll.u32 [#allocation2], 4
      %s998 = int_to_ptr.vmem [resolvable:$true] %s997
      %1000 = dma.vmem_to_hbm [thread:$0]  %s998, 32, %s9, [#allocation3]
    $region41: #{forward.1} parent=1 // pred_fallthru
      _
    // Predicated region
    $region42: #{forward.1} parent=1 // pred_check
      _
    $region43: #{forward.1} parent=1 // pred_check_branch
      %1002 = sbr.rel (0) target = $region45
    $region44: #{forward.1} parent=1 // pred_region
      %1003 = dma.done [#allocation3], 32
    $region45: #{forward.1} parent=1 // pred_fallthru
      _
    %1004 = vsyncpa [#allocation3], 1

</llo_original>
